<compile_context>
chip_gen: v7x
topology: tpu7x:2x2x1
jax: 0.10.0
libtpu: 0.0.40
codegen_flags: <defaults>
</compile_context>

<pallas_src>
import jax
import jax.numpy as jnp
from jax.experimental import pallas as pl
from jax.experimental.pallas import tpu as pltpu

_PAD = 128  # lane width: hidden feature dimensions are zero-padded to this


def qnetwork_kernel(x_ref,
                    w1_ref, b1_ref,
                    w2_ref, b2_ref,
                    w3_ref, b3_ref,
                    w4_ref, b4_ref,
                    wo_ref, bo_ref,
                    out_ref):
    """One (TB, state_size) batch tile through the 5-layer MLP.

    Matmuls run on the MXU (bf16 or f32 inputs, f32 accumulation); bias-add and
    ReLU are kept in f32 on the VPU.  The final store is narrowed to the real
    action columns (static lane mask).
    """
    mm_dtype = w1_ref.dtype  # bf16 fast path (or f32)

    # Layer 1: (TB, state_size) @ (state_size, 128); Mosaic pads K internally.
    h = jnp.dot(x_ref[...].astype(mm_dtype), w1_ref[...],
                preferred_element_type=jnp.float32)
    h = jnp.maximum(h + b1_ref[...], 0.0)

    h = jnp.dot(h.astype(mm_dtype), w2_ref[...],
                preferred_element_type=jnp.float32)
    h = jnp.maximum(h + b2_ref[...], 0.0)

    h = jnp.dot(h.astype(mm_dtype), w3_ref[...],
                preferred_element_type=jnp.float32)
    h = jnp.maximum(h + b3_ref[...], 0.0)

    h = jnp.dot(h.astype(mm_dtype), w4_ref[...],
                preferred_element_type=jnp.float32)
    h = jnp.maximum(h + b4_ref[...], 0.0)

    y = jnp.dot(h.astype(mm_dtype), wo_ref[...],
                preferred_element_type=jnp.float32)
    y = y + bo_ref[...]
    # Narrow store: only the real action columns (out_ref last dim == action_size).
    out_ref[...] = y[:, :out_ref.shape[1]]


def _round_up(n, m):
    return ((n + m - 1) // m) * m


def _pad2d(a, rows, cols):
    r, c = a.shape
    return jnp.pad(a, ((0, rows - r), (0, cols - c)))


def prepare_qnetwork_params(params, *, use_bf16=True):
    """One-time padding + cast of the weights/biases (hoisted out of the hot path).

    params: list of (w, b), w: (in_features, out_features), b: (1, out_features).
    Layer 1 keeps its native K (= state_size); all output dims are padded to 128.
    """
    mm_dtype = jnp.bfloat16 if use_bf16 else jnp.float32
    state_size = params[0][0].shape[0]
    action_size = params[-1][0].shape[1]
    flat = []
    for li, (w, b) in enumerate(params):
        k_pad = w.shape[0] if li == 0 else _PAD   # native K only for layer 1
        flat.append(_pad2d(w, k_pad, _PAD).astype(mm_dtype))
        flat.append(_pad2d(b, 1, _PAD).astype(jnp.float32))
    return {"flat": tuple(flat),
            "state_size": state_size,
            "action_size": action_size}


def _choose_batch_tile(batch, max_tile):
    """Large tile to amortize per-step overhead, but keep >= 2 grid steps when
    the batch allows so v7x megacore can split the batch across its 2 TCs."""
    b8 = _round_up(max(batch, 1), 8)
    tb = min(max_tile, max(8, _round_up(pl.cdiv(b8, 2), 8)))
    return tb


def qnetwork_forward(x, prepared, *, batch_tile=4096):
    """x: (B, state_size) f32.  prepared: output of prepare_qnetwork_params.

    Returns (B, action_size) f32.
    """
    flat = prepared["flat"]
    state_size = prepared["state_size"]
    action_size = prepared["action_size"]

    B, xs = x.shape
    assert xs == state_size, (xs, state_size)

    tb = _choose_batch_tile(B, batch_tile)
    b_pad = _round_up(B, tb)
    if b_pad != B:
        x = jnp.pad(x, ((0, b_pad - B), (0, 0)))   # batch rows only (small)
    grid = (b_pad // tb,)

    # x/out are batch-tiled and auto-pipelined; weights/biases are VMEM-resident
    # (index_map -> (0, 0), full-array blocks).
    x_spec = pl.BlockSpec((tb, state_size), lambda i: (i, 0))
    in_specs = [x_spec]
    for arr in flat:
        in_specs.append(pl.BlockSpec(arr.shape, lambda i: (0, 0)))
    out_spec = pl.BlockSpec((tb, action_size), lambda i: (i, 0))

    out = pl.pallas_call(
        qnetwork_kernel,
        out_shape=jax.ShapeDtypeStruct((b_pad, action_size), jnp.float32),
        grid=grid,
        in_specs=in_specs,
        out_specs=out_spec,
        compiler_params=pltpu.CompilerParams(
            dimension_semantics=("parallel",)),
    )(x, *flat)

    return out[:B] if b_pad != B else out


def init_qnetwork_params(key, state_size, action_size):
    """Deterministic PyTorch-style (Kaiming-uniform-ish) init.

    Weights stored (in_features, out_features); biases (1, out_features).
    Master copy is f32; prepare_qnetwork_params pads/casts for the kernel.
    """
    dims = [state_size, 64, 128, 64, 32, action_size]
    params = []
    for i in range(len(dims) - 1):
        fan_in, fan_out = dims[i], dims[i + 1]
        key, kw, kb = jax.random.split(key, 3)
        bound = 1.0 / (fan_in ** 0.5)
        w = jax.random.uniform(kw, (fan_in, fan_out), jnp.float32,
                               minval=-bound, maxval=bound)
        b = jax.random.uniform(kb, (1, fan_out), jnp.float32,
                               minval=-bound, maxval=bound)
        params.append((w, b))
    return params


def qnetwork_reference(x, params):
    """Pure-JAX f32 reference of the PyTorch forward pass."""
    h = x
    for (w, b) in params[:-1]:
        h = jnp.maximum(h @ w + b, 0.0)
    w, b = params[-1]
    return h @ w + b


def qnetwork_reference_bf16(x, params):
    """Reference mirroring the kernel's bf16-matmul / f32-accumulate path."""
    h = x.astype(jnp.bfloat16)
    for i, (w, b) in enumerate(params):
        y = jnp.dot(h, w.astype(jnp.bfloat16),
                    preferred_element_type=jnp.float32) + b
        if i == len(params) - 1:
            return y
        h = jnp.maximum(y, 0.0).astype(jnp.bfloat16)


if __name__ == "__main__":
    key = jax.random.PRNGKey(0)

    state_size = 8
    action_size = 4

    params = init_qnetwork_params(key, state_size, action_size)
    prepared = prepare_qnetwork_params(params, use_bf16=True)  # hoisted, once

    # --- small batch (tiny grid) ---
    batch = 2
    key, kx = jax.random.split(key)
    x = jax.random.normal(kx, (batch, state_size), jnp.float32)

    out = qnetwork_forward(x, prepared)
    out = jax.block_until_ready(out)
    assert out.shape == (batch, action_size)

    ref_bf16 = qnetwork_reference_bf16(x, params)
    assert jnp.allclose(out, ref_bf16, atol=1e-3, rtol=1e-3)
    ref_f32 = qnetwork_reference(x, params)
    assert jnp.allclose(out, ref_f32, atol=5e-2, rtol=5e-2)

    # --- larger, non-multiple batch exercising multi-step grid + batch padding ---
    batch2 = 33
    key, kx2 = jax.random.split(key)
    x2 = jax.random.normal(kx2, (batch2, state_size), jnp.float32)
    out2 = qnetwork_forward(x2, prepared, batch_tile=16)
    out2 = jax.block_until_ready(out2)
    assert out2.shape == (batch2, action_size)
    assert jnp.allclose(out2, qnetwork_reference_bf16(x2, params),
                        atol=1e-3, rtol=1e-3)
    assert jnp.allclose(out2, qnetwork_reference(x2, params),
                        atol=5e-2, rtol=5e-2)

    print("KERNEL_OK")
</pallas_src>

<mosaic_0001>
module attributes {stable_mosaic.version = 11 : i64} {
  func.func @qnetwork_kernel(%arg0: i32, %arg1: memref<8x8xf32, #tpu.memory_space<vmem>>, %arg2: memref<8x128xbf16, #tpu.memory_space<vmem>>, %arg3: memref<1x128xf32, #tpu.memory_space<vmem>>, %arg4: memref<128x128xbf16, #tpu.memory_space<vmem>>, %arg5: memref<1x128xf32, #tpu.memory_space<vmem>>, %arg6: memref<128x128xbf16, #tpu.memory_space<vmem>>, %arg7: memref<1x128xf32, #tpu.memory_space<vmem>>, %arg8: memref<128x128xbf16, #tpu.memory_space<vmem>>, %arg9: memref<1x128xf32, #tpu.memory_space<vmem>>, %arg10: memref<128x128xbf16, #tpu.memory_space<vmem>>, %arg11: memref<1x128xf32, #tpu.memory_space<vmem>>, %arg12: memref<8x4xf32, #tpu.memory_space<vmem>>) attributes {dimension_semantics = [#tpu.dimension_semantics<parallel>], iteration_bounds = array<i64: 1>, scalar_prefetch = 0 : i64, scratch_operands = 0 : i64, tpu.core_type = #tpu.core_type<tc>, window_params = [{transform_indices = @transform_0, window_bounds = array<i64: 8, 8>}, {pipeline_mode = #tpu.pipeline_mode<synchronous>, transform_indices = @transform_1, window_bounds = array<i64: 8, 128>}, {pipeline_mode = #tpu.pipeline_mode<synchronous>, transform_indices = @transform_2, window_bounds = array<i64: 1, 128>}, {pipeline_mode = #tpu.pipeline_mode<synchronous>, transform_indices = @transform_3, window_bounds = array<i64: 128, 128>}, {pipeline_mode = #tpu.pipeline_mode<synchronous>, transform_indices = @transform_4, window_bounds = array<i64: 1, 128>}, {pipeline_mode = #tpu.pipeline_mode<synchronous>, transform_indices = @transform_5, window_bounds = array<i64: 128, 128>}, {pipeline_mode = #tpu.pipeline_mode<synchronous>, transform_indices = @transform_6, window_bounds = array<i64: 1, 128>}, {pipeline_mode = #tpu.pipeline_mode<synchronous>, transform_indices = @transform_7, window_bounds = array<i64: 128, 128>}, {pipeline_mode = #tpu.pipeline_mode<synchronous>, transform_indices = @transform_8, window_bounds = array<i64: 1, 128>}, {pipeline_mode = #tpu.pipeline_mode<synchronous>, transform_indices = @transform_9, window_bounds = array<i64: 128, 128>}, {pipeline_mode = #tpu.pipeline_mode<synchronous>, transform_indices = @transform_10, window_bounds = array<i64: 1, 128>}, {transform_indices = @transform_11, window_bounds = array<i64: 8, 4>}]} {
    %c0 = arith.constant 0 : index
    %c0_0 = arith.constant 0 : index
    %0 = vector.load %arg1[%c0, %c0_0] : memref<8x8xf32, #tpu.memory_space<vmem>>, vector<8x8xf32>
    %1 = arith.truncf %0 : vector<8x8xf32> to vector<8x8xbf16>
    %c0_1 = arith.constant 0 : index
    %c0_2 = arith.constant 0 : index
    %2 = vector.load %arg2[%c0_1, %c0_2] : memref<8x128xbf16, #tpu.memory_space<vmem>>, vector<8x128xbf16>
    %cst = arith.constant dense<0.000000e+00> : vector<8x128xf32>
    %3 = tpu.matmul %1, %2, %cst {dimension_numbers = #tpu.dot_dimension_numbers<[1], [0], [0], [1], [0, 0, 1, 1], [], []>} : vector<8x8xbf16>, vector<8x128xbf16>, vector<8x128xf32> -> vector<8x128xf32>
    %c0_3 = arith.constant 0 : index
    %c0_4 = arith.constant 0 : index
    %4 = vector.load %arg3[%c0_3, %c0_4] : memref<1x128xf32, #tpu.memory_space<vmem>>, vector<1x128xf32>
    %5 = vector.broadcast %4 : vector<1x128xf32> to vector<8x128xf32>
    %6 = arith.addf %3, %5 : vector<8x128xf32>
    %cst_5 = arith.constant 0.000000e+00 : f32
    %7 = vector.broadcast %cst_5 : f32 to vector<8x128xf32>
    %8 = arith.maximumf %6, %7 : vector<8x128xf32>
    %9 = arith.truncf %8 : vector<8x128xf32> to vector<8x128xbf16>
    %c0_6 = arith.constant 0 : index
    %c0_7 = arith.constant 0 : index
    %10 = vector.load %arg4[%c0_6, %c0_7] : memref<128x128xbf16, #tpu.memory_space<vmem>>, vector<128x128xbf16>
    %cst_8 = arith.constant dense<0.000000e+00> : vector<8x128xf32>
    %11 = tpu.matmul %9, %10, %cst_8 {dimension_numbers = #tpu.dot_dimension_numbers<[1], [0], [0], [1], [0, 0, 1, 1], [], []>} : vector<8x128xbf16>, vector<128x128xbf16>, vector<8x128xf32> -> vector<8x128xf32>
    %c0_9 = arith.constant 0 : index
    %c0_10 = arith.constant 0 : index
    %12 = vector.load %arg5[%c0_9, %c0_10] : memref<1x128xf32, #tpu.memory_space<vmem>>, vector<1x128xf32>
    %13 = vector.broadcast %12 : vector<1x128xf32> to vector<8x128xf32>
    %14 = arith.addf %11, %13 : vector<8x128xf32>
    %cst_11 = arith.constant 0.000000e+00 : f32
    %15 = vector.broadcast %cst_11 : f32 to vector<8x128xf32>
    %16 = arith.maximumf %14, %15 : vector<8x128xf32>
    %17 = arith.truncf %16 : vector<8x128xf32> to vector<8x128xbf16>
    %c0_12 = arith.constant 0 : index
    %c0_13 = arith.constant 0 : index
    %18 = vector.load %arg6[%c0_12, %c0_13] : memref<128x128xbf16, #tpu.memory_space<vmem>>, vector<128x128xbf16>
    %cst_14 = arith.constant dense<0.000000e+00> : vector<8x128xf32>
    %19 = tpu.matmul %17, %18, %cst_14 {dimension_numbers = #tpu.dot_dimension_numbers<[1], [0], [0], [1], [0, 0, 1, 1], [], []>} : vector<8x128xbf16>, vector<128x128xbf16>, vector<8x128xf32> -> vector<8x128xf32>
    %c0_15 = arith.constant 0 : index
    %c0_16 = arith.constant 0 : index
    %20 = vector.load %arg7[%c0_15, %c0_16] : memref<1x128xf32, #tpu.memory_space<vmem>>, vector<1x128xf32>
    %21 = vector.broadcast %20 : vector<1x128xf32> to vector<8x128xf32>
    %22 = arith.addf %19, %21 : vector<8x128xf32>
    %cst_17 = arith.constant 0.000000e+00 : f32
    %23 = vector.broadcast %cst_17 : f32 to vector<8x128xf32>
    %24 = arith.maximumf %22, %23 : vector<8x128xf32>
    %25 = arith.truncf %24 : vector<8x128xf32> to vector<8x128xbf16>
    %c0_18 = arith.constant 0 : index
    %c0_19 = arith.constant 0 : index
    %26 = vector.load %arg8[%c0_18, %c0_19] : memref<128x128xbf16, #tpu.memory_space<vmem>>, vector<128x128xbf16>
    %cst_20 = arith.constant dense<0.000000e+00> : vector<8x128xf32>
    %27 = tpu.matmul %25, %26, %cst_20 {dimension_numbers = #tpu.dot_dimension_numbers<[1], [0], [0], [1], [0, 0, 1, 1], [], []>} : vector<8x128xbf16>, vector<128x128xbf16>, vector<8x128xf32> -> vector<8x128xf32>
    %c0_21 = arith.constant 0 : index
    %c0_22 = arith.constant 0 : index
    %28 = vector.load %arg9[%c0_21, %c0_22] : memref<1x128xf32, #tpu.memory_space<vmem>>, vector<1x128xf32>
    %29 = vector.broadcast %28 : vector<1x128xf32> to vector<8x128xf32>
    %30 = arith.addf %27, %29 : vector<8x128xf32>
    %cst_23 = arith.constant 0.000000e+00 : f32
    %31 = vector.broadcast %cst_23 : f32 to vector<8x128xf32>
    %32 = arith.maximumf %30, %31 : vector<8x128xf32>
    %33 = arith.truncf %32 : vector<8x128xf32> to vector<8x128xbf16>
    %c0_24 = arith.constant 0 : index
    %c0_25 = arith.constant 0 : index
    %34 = vector.load %arg10[%c0_24, %c0_25] : memref<128x128xbf16, #tpu.memory_space<vmem>>, vector<128x128xbf16>
    %cst_26 = arith.constant dense<0.000000e+00> : vector<8x128xf32>
    %35 = tpu.matmul %33, %34, %cst_26 {dimension_numbers = #tpu.dot_dimension_numbers<[1], [0], [0], [1], [0, 0, 1, 1], [], []>} : vector<8x128xbf16>, vector<128x128xbf16>, vector<8x128xf32> -> vector<8x128xf32>
    %c0_27 = arith.constant 0 : index
    %c0_28 = arith.constant 0 : index
    %36 = vector.load %arg11[%c0_27, %c0_28] : memref<1x128xf32, #tpu.memory_space<vmem>>, vector<1x128xf32>
    %37 = vector.broadcast %36 : vector<1x128xf32> to vector<8x128xf32>
    %38 = arith.addf %35, %37 : vector<8x128xf32>
    %39 = vector.extract_strided_slice %38 {offsets = [0, 0], sizes = [8, 4], strides = [1, 1]} : vector<8x128xf32> to vector<8x4xf32>
    %c0_29 = arith.constant 0 : index
    %c0_30 = arith.constant 0 : index
    %40 = vector.load %arg12[%c0_29, %c0_30] : memref<8x4xf32, #tpu.memory_space<vmem>>, vector<8x4xf32>
    tpu.vector_store %arg12[%c0_29, %c0_30], %39 {strides = array<i32>} : memref<8x4xf32, #tpu.memory_space<vmem>>, vector<8x4xf32>,
    return
  }
  func.func @transform_0(%arg0: i32) -> (i32, i32) {
    %c0_i32 = arith.constant 0 : i32
    %c0_i32_0 = arith.constant 0 : i32
    return %arg0, %c0_i32 : i32, i32
  }
  func.func @transform_1(%arg0: i32) -> (i32, i32) {
    %c0_i32 = arith.constant 0 : i32
    %c0_i32_0 = arith.constant 0 : i32
    %c0_i32_1 = arith.constant 0 : i32
    return %c0_i32, %c0_i32_0 : i32, i32
  }
  func.func @transform_2(%arg0: i32) -> (i32, i32) {
    %c0_i32 = arith.constant 0 : i32
    %c0_i32_0 = arith.constant 0 : i32
    %c0_i32_1 = arith.constant 0 : i32
    return %c0_i32, %c0_i32_0 : i32, i32
  }
  func.func @transform_3(%arg0: i32) -> (i32, i32) {
    %c0_i32 = arith.constant 0 : i32
    %c0_i32_0 = arith.constant 0 : i32
    %c0_i32_1 = arith.constant 0 : i32
    return %c0_i32, %c0_i32_0 : i32, i32
  }
  func.func @transform_4(%arg0: i32) -> (i32, i32) {
    %c0_i32 = arith.constant 0 : i32
    %c0_i32_0 = arith.constant 0 : i32
    %c0_i32_1 = arith.constant 0 : i32
    return %c0_i32, %c0_i32_0 : i32, i32
  }
  func.func @transform_5(%arg0: i32) -> (i32, i32) {
    %c0_i32 = arith.constant 0 : i32
    %c0_i32_0 = arith.constant 0 : i32
    %c0_i32_1 = arith.constant 0 : i32
    return %c0_i32, %c0_i32_0 : i32, i32
  }
  func.func @transform_6(%arg0: i32) -> (i32, i32) {
    %c0_i32 = arith.constant 0 : i32
    %c0_i32_0 = arith.constant 0 : i32
    %c0_i32_1 = arith.constant 0 : i32
    return %c0_i32, %c0_i32_0 : i32, i32
  }
  func.func @transform_7(%arg0: i32) -> (i32, i32) {
    %c0_i32 = arith.constant 0 : i32
    %c0_i32_0 = arith.constant 0 : i32
    %c0_i32_1 = arith.constant 0 : i32
    return %c0_i32, %c0_i32_0 : i32, i32
  }
  func.func @transform_8(%arg0: i32) -> (i32, i32) {
    %c0_i32 = arith.constant 0 : i32
    %c0_i32_0 = arith.constant 0 : i32
    %c0_i32_1 = arith.constant 0 : i32
    return %c0_i32, %c0_i32_0 : i32, i32
  }
  func.func @transform_9(%arg0: i32) -> (i32, i32) {
    %c0_i32 = arith.constant 0 : i32
    %c0_i32_0 = arith.constant 0 : i32
    %c0_i32_1 = arith.constant 0 : i32
    return %c0_i32, %c0_i32_0 : i32, i32
  }
  func.func @transform_10(%arg0: i32) -> (i32, i32) {
    %c0_i32 = arith.constant 0 : i32
    %c0_i32_0 = arith.constant 0 : i32
    %c0_i32_1 = arith.constant 0 : i32
    return %c0_i32, %c0_i32_0 : i32, i32
  }
  func.func @transform_11(%arg0: i32) -> (i32, i32) {
    %c0_i32 = arith.constant 0 : i32
    %c0_i32_0 = arith.constant 0 : i32
    return %arg0, %c0_i32 : i32, i32
  }
}

</mosaic_0001>

<llo_original>
// kernel: tpu_custom_call.1
$region0: #{tpu_custom_call.1}
  #allocation0 [shape = 'u32[]', space=smem, size = 0x4, offset = 0x4, fixed_abs, tag = 'smem constant byte address 0x4 - core index']
  #allocation1 [shape = 'u32[144,128]{1,0:T(1,128)}', space=vmem, size = 0x12000, scoped, tag = 'internal scratch']
  %s0 = inlined_call_operand.hbm [shape: f32[8,8], index: 0, kind: input, shape index: {}]
  %s1 = inlined_call_operand.hbm [shape: bf16[8,128], index: 1, kind: input, shape index: {}]
  %s2 = inlined_call_operand.vmem [shape: f32[1,128], index: 2, kind: input, shape index: {}]
  %s3 = inlined_call_operand.hbm [shape: bf16[128,128], index: 3, kind: input, shape index: {}]
  %s4 = inlined_call_operand.vmem [shape: f32[1,128], index: 4, kind: input, shape index: {}]
  %s5 = inlined_call_operand.hbm [shape: bf16[128,128], index: 5, kind: input, shape index: {}]
  %s6 = inlined_call_operand.vmem [shape: f32[1,128], index: 6, kind: input, shape index: {}]
  %s7 = inlined_call_operand.hbm [shape: bf16[128,128], index: 7, kind: input, shape index: {}]
  %s8 = inlined_call_operand.vmem [shape: f32[1,128], index: 8, kind: input, shape index: {}]
  %s9 = inlined_call_operand.hbm [shape: bf16[128,128], index: 9, kind: input, shape index: {}]
  %s10 = inlined_call_operand.vmem [shape: f32[1,128], index: 10, kind: input, shape index: {}]
  %s11 = inlined_call_operand.vmem [shape: f32[8,4], index: 11, kind: output, shape index: {}]
  %s12 = sld [smem:[#allocation0]]
  $region78: #{tpu_custom_call.1} parent=0
    _
  %s14 = ssub.s32 1, %s12
  %s15 = scalar_select 0, %s14, %s12
  $region1: #{tpu_custom_call.1} parent=0
    #allocation2 [shape = 'u8[4096]{0}', space=vmem, size = 0x1000, scoped, tag = 'input window, operand 0, single buffered']
    #allocation3 [shape = 's32[1]{0}', space=sflag, size = 0x4, scoped, tag = 'scoped memory for tpu_custom_call.1']
    #allocation4 [shape = 'u8[2048]{0}', space=vmem, size = 0x800, scoped, tag = 'input window, operand 1, single buffered']
    #allocation5 [shape = 's32[1]{0}', space=sflag, size = 0x4, scoped, tag = 'scoped memory for tpu_custom_call.1']
    #allocation6 [shape = 'u8[32768]{0}', space=vmem, size = 0x8000, scoped, tag = 'input window, operand 3, single buffered']
    #allocation7 [shape = 'u8[32768]{0}', space=vmem, size = 0x8000, scoped, tag = 'input window, operand 5, single buffered']
    #allocation8 [shape = 's32[1]{0}', space=sflag, size = 0x4, scoped, tag = 'scoped memory for tpu_custom_call.1']
    #allocation9 [shape = 'u8[32768]{0}', space=vmem, size = 0x8000, scoped, tag = 'input window, operand 7, single buffered']
    #allocation10 [shape = 'u8[32768]{0}', space=vmem, size = 0x8000, scoped, tag = 'input window, operand 9, single buffered']
    #allocation11 [shape = 's32[1]{0}', space=sflag, size = 0x4, scoped, tag = 'scoped memory for tpu_custom_call.1']
    %16 = vsyncpa [#allocation3], 0
    %17 = vsyncpa [#allocation5], 0
    %18 = vsyncpa [#allocation8], 0
    %19 = vsyncpa [#allocation11], 0
    // Predicated region
    $region2: #{tpu_custom_call.1} parent=1 // pred_check
      _
    $region3: #{tpu_custom_call.1} parent=1 // pred_check_branch
      %21 = sbr.rel (0) target = $region5
    $region4: #{tpu_custom_call.1} parent=1 // pred_region
      %s23 = ssub.s32 128, 128
      %24 = vsyncadd [#allocation3], %s23
      %s26 = sshll.u32 [#allocation2], 4
      %s27 = int_to_ptr.vmem [resolvable:$true] %s26
      %29 = dma.hbm_to_vmem [thread:$0]  %s0, 128, %s27, [#allocation3]
    $region5: #{tpu_custom_call.1} parent=1 // pred_fallthru
      _
    // Predicated region
    $region6: #{tpu_custom_call.1} parent=1 // pred_check
      _
    $region7: #{tpu_custom_call.1} parent=1 // pred_check_branch
      %31 = sbr.rel (0) target = $region9
    $region8: #{tpu_custom_call.1} parent=1 // pred_region
      %s33 = ssub.s32 64, 64
      %34 = vsyncadd [#allocation5], %s33
      %s36 = sshll.u32 [#allocation4], 4
      %s37 = int_to_ptr.vmem [resolvable:$true] %s36
      %39 = dma.hbm_to_vmem [thread:$0]  %s1, 64, %s37, [#allocation5]
    $region9: #{tpu_custom_call.1} parent=1 // pred_fallthru
      _
    // Predicated region
    $region10: #{tpu_custom_call.1} parent=1 // pred_check
      _
    $region11: #{tpu_custom_call.1} parent=1 // pred_check_branch
      %41 = sbr.rel (0) target = $region13
    $region12: #{tpu_custom_call.1} parent=1 // pred_region
      _
    $region13: #{tpu_custom_call.1} parent=1 // pred_fallthru
      _
    // Predicated region
    $region14: #{tpu_custom_call.1} parent=1 // pred_check
      _
    $region15: #{tpu_custom_call.1} parent=1 // pred_check_branch
      %43 = sbr.rel (0) target = $region17
    $region16: #{tpu_custom_call.1} parent=1 // pred_region
      %s45 = ssub.s32 1024, 1024
      %46 = vsyncadd [#allocation5], %s45
      %s47 = sshll.u32 [#allocation6], 4
      %s48 = int_to_ptr.vmem [resolvable:$true] %s47
      %53 = dma.hbm_to_vmem [thread:$0]  %s3, 1024, %s48, [#allocation5], 64, 64, 4
    $region17: #{tpu_custom_call.1} parent=1 // pred_fallthru
      _
    // Predicated region
    $region18: #{tpu_custom_call.1} parent=1 // pred_check
      _
    $region19: #{tpu_custom_call.1} parent=1 // pred_check_branch
      %55 = sbr.rel (0) target = $region21
    $region20: #{tpu_custom_call.1} parent=1 // pred_region
      _
    $region21: #{tpu_custom_call.1} parent=1 // pred_fallthru
      _
    // Predicated region
    $region22: #{tpu_custom_call.1} parent=1 // pred_check
      _
    $region23: #{tpu_custom_call.1} parent=1 // pred_check_branch
      %57 = sbr.rel (0) target = $region25
    $region24: #{tpu_custom_call.1} parent=1 // pred_region
      %s59 = ssub.s32 1024, 1024
      %60 = vsyncadd [#allocation8], %s59
      %s61 = sshll.u32 [#allocation7], 4
      %s62 = int_to_ptr.vmem [resolvable:$true] %s61
      %67 = dma.hbm_to_vmem [thread:$0]  %s5, 1024, %s62, [#allocation8], 64, 64, 4
    $region25: #{tpu_custom_call.1} parent=1 // pred_fallthru
      _
    // Predicated region
    $region26: #{tpu_custom_call.1} parent=1 // pred_check
      _
    $region27: #{tpu_custom_call.1} parent=1 // pred_check_branch
      %69 = sbr.rel (0) target = $region29
    $region28: #{tpu_custom_call.1} parent=1 // pred_region
      _
    $region29: #{tpu_custom_call.1} parent=1 // pred_fallthru
      _
    // Predicated region
    $region30: #{tpu_custom_call.1} parent=1 // pred_check
      _
    $region31: #{tpu_custom_call.1} parent=1 // pred_check_branch
      %71 = sbr.rel (0) target = $region33
    $region32: #{tpu_custom_call.1} parent=1 // pred_region
      %s73 = ssub.s32 1024, 1024
      %74 = vsyncadd [#allocation8], %s73
      %s75 = sshll.u32 [#allocation9], 4
      %s76 = int_to_ptr.vmem [resolvable:$true] %s75
      %81 = dma.hbm_to_vmem [thread:$0]  %s7, 1024, %s76, [#allocation8], 64, 64, 4
    $region33: #{tpu_custom_call.1} parent=1 // pred_fallthru
      _
    // Predicated region
    $region34: #{tpu_custom_call.1} parent=1 // pred_check
      _
    $region35: #{tpu_custom_call.1} parent=1 // pred_check_branch
      %83 = sbr.rel (0) target = $region37
    $region36: #{tpu_custom_call.1} parent=1 // pred_region
      _
    $region37: #{tpu_custom_call.1} parent=1 // pred_fallthru
      _
    // Predicated region
    $region38: #{tpu_custom_call.1} parent=1 // pred_check
      _
    $region39: #{tpu_custom_call.1} parent=1 // pred_check_branch
      %85 = sbr.rel (0) target = $region41
    $region40: #{tpu_custom_call.1} parent=1 // pred_region
      %s87 = ssub.s32 1024, 1024
      %88 = vsyncadd [#allocation11], %s87
      %s89 = sshll.u32 [#allocation10], 4
      %s90 = int_to_ptr.vmem [resolvable:$true] %s89
      %95 = dma.hbm_to_vmem [thread:$0]  %s9, 1024, %s90, [#allocation11], 64, 64, 4
    $region41: #{tpu_custom_call.1} parent=1 // pred_fallthru
      _
    // Predicated region
    $region42: #{tpu_custom_call.1} parent=1 // pred_check
      _
    $region43: #{tpu_custom_call.1} parent=1 // pred_check_branch
      %97 = sbr.rel (0) target = $region45
    $region44: #{tpu_custom_call.1} parent=1 // pred_region
      _
    $region45: #{tpu_custom_call.1} parent=1 // pred_fallthru
      _
    // Predicated region
    $region46: #{tpu_custom_call.1} parent=1 // pred_check
      _
    $region47: #{tpu_custom_call.1} parent=1 // pred_check_branch
      %99 = sbr.rel (0) target = $region49
    $region48: #{tpu_custom_call.1} parent=1 // pred_region
      %100 = dma.done [#allocation3], 128
    $region49: #{tpu_custom_call.1} parent=1 // pred_fallthru
      _
    // Predicated region
    $region50: #{tpu_custom_call.1} parent=1 // pred_check
      _
    $region51: #{tpu_custom_call.1} parent=1 // pred_check_branch
      %102 = sbr.rel (0) target = $region53
    $region52: #{tpu_custom_call.1} parent=1 // pred_region
      %103 = dma.done [#allocation5], 64
    $region53: #{tpu_custom_call.1} parent=1 // pred_fallthru
      _
    // Predicated region
    $region54: #{tpu_custom_call.1} parent=1 // pred_check
      _
    $region55: #{tpu_custom_call.1} parent=1 // pred_check_branch
      %105 = sbr.rel (0) target = $region57
    $region56: #{tpu_custom_call.1} parent=1 // pred_region
      %106 = dma.done [#allocation5], 1024
    $region57: #{tpu_custom_call.1} parent=1 // pred_fallthru
      _
    // Predicated region
    $region58: #{tpu_custom_call.1} parent=1 // pred_check
      _
    $region59: #{tpu_custom_call.1} parent=1 // pred_check_branch
      %108 = sbr.rel (0) target = $region61
    $region60: #{tpu_custom_call.1} parent=1 // pred_region
      %109 = dma.done [#allocation8], 1024
    $region61: #{tpu_custom_call.1} parent=1 // pred_fallthru
      _
    // Predicated region
    $region62: #{tpu_custom_call.1} parent=1 // pred_check
      _
    $region63: #{tpu_custom_call.1} parent=1 // pred_check_branch
      %111 = sbr.rel (0) target = $region65
    $region64: #{tpu_custom_call.1} parent=1 // pred_region
      %112 = dma.done [#allocation8], 1024
    $region65: #{tpu_custom_call.1} parent=1 // pred_fallthru
      _
    // Predicated region
    $region66: #{tpu_custom_call.1} parent=1 // pred_check
      _
    $region67: #{tpu_custom_call.1} parent=1 // pred_check_branch
      %114 = sbr.rel (0) target = $region69
    $region68: #{tpu_custom_call.1} parent=1 // pred_region
      %115 = dma.done [#allocation11], 1024
    $region69: #{tpu_custom_call.1} parent=1 // pred_fallthru
      _
    %v117 = vld [vmem:[#allocation2] sm:$0xff]
    %v118 = vpack.c.bf16 %v117, %v117
    %v119 = vld [vmem:[#allocation4] sm:$0xf]
    %v120 = vld [vmem:[%s2] sm:$0x1]
    %v122 = vlaneseq
    %v123 = vshrl.u32 %v122, 7
    %v124 = vsub.s32 0, %v123
    %v125 = vrot.slane %v120, %v124
    %vm127 = vcmask 64512
    %v129 = vsel %vm127, %v118, 0
    %vm131 = vcmask 1043456
    %v133 = vsel %vm131, %v119, 0
    %135 = vmatprep.subr.bf16.mxu0 0
    %136 = vmatpush1.bf16.msra.mxu0 %v133
    %137 = vmatprep.subr.bf16.mxu0 0
    %138 = vmatpush1.bf16.msra.mxu0 0
    %139 = vmatprep.subr.bf16.mxu0 0
    %140 = vmatpush1.bf16.msra.mxu0 0
    %141 = vmatprep.subr.bf16.mxu0 0
    %142 = vmatpush1.bf16.msra.mxu0 0
    %143 = vmatprep.subr.bf16.mxu0 0
    %144 = vmatpush1.bf16.msra.mxu0 0
    %145 = vmatprep.subr.bf16.mxu0 0
    %146 = vmatpush1.bf16.msra.mxu0 0
    %147 = vmatprep.subr.bf16.mxu0 0
    %148 = vmatpush1.bf16.msra.mxu0 0
    %149 = vmatprep.subr.bf16.mxu0 0
    %150 = vmatpush1.bf16.msra.mxu0 0
    %151 = vmatprep.subr.bf16.mxu0 0
    %152 = vmatpush1.bf16.msra.mxu0 0
    %153 = vmatprep.subr.bf16.mxu0 0
    %154 = vmatpush1.bf16.msra.mxu0 0
    %155 = vmatprep.subr.bf16.mxu0 0
    %156 = vmatpush1.bf16.msra.mxu0 0
    %157 = vmatprep.subr.bf16.mxu0 0
    %158 = vmatpush1.bf16.msra.mxu0 0
    %159 = vmatprep.subr.bf16.mxu0 0
    %160 = vmatpush1.bf16.msra.mxu0 0
    %161 = vmatprep.subr.bf16.mxu0 0
    %162 = vmatpush1.bf16.msra.mxu0 0
    %163 = vmatprep.subr.bf16.mxu0 0
    %164 = vmatpush1.bf16.msra.mxu0 0
    %165 = vmatprep.subr.bf16.mxu0 0
    %166 = vmatpush1.bf16.msra.mxu0 0
    %167 = vmatprep.mubr.bf16.mxu0 0
    %168 = vmatmul.mubr.bf16.gmra.mrb[0].mxu0 %v129
    %v169 = vpop.f32.mrb[0].mxu0
    %v170 = vadd.f32 %v125, %v169
    %v171 = vpop.f32.mrb[0].mxu0
    %v172 = vpop.f32.mrb[0].mxu0
    %v173 = vpop.f32.mrb[0].mxu0
    %174 = vdwg.mxu0
    %v175 = vmax.f32 %v170, 0.0
    %v176 = vpack.c.bf16 %v175, %v175
    %v177 = vld [vmem:[#allocation6] sm:$0xf]
    %v178 = vld [vmem:[#allocation6 + $0x4] sm:$0xf]
    %v179 = vld [vmem:[#allocation6 + $0x8] sm:$0xf]
    %v180 = vld [vmem:[#allocation6 + $0xc] sm:$0xf]
    %v181 = vld [vmem:[#allocation6 + $0x10] sm:$0xf]
    %v182 = vld [vmem:[#allocation6 + $0x14] sm:$0xf]
    %v183 = vld [vmem:[#allocation6 + $0x18] sm:$0xf]
    %v184 = vld [vmem:[#allocation6 + $0x1c] sm:$0xf]
    %v185 = vld [vmem:[#allocation6 + $0x20] sm:$0xf]
    %v186 = vld [vmem:[#allocation6 + $0x24] sm:$0xf]
    %v187 = vld [vmem:[#allocation6 + $0x28] sm:$0xf]
    %v188 = vld [vmem:[#allocation6 + $0x2c] sm:$0xf]
    %v189 = vld [vmem:[#allocation6 + $0x30] sm:$0xf]
    %v190 = vld [vmem:[#allocation6 + $0x34] sm:$0xf]
    %v191 = vld [vmem:[#allocation6 + $0x38] sm:$0xf]
    %v192 = vld [vmem:[#allocation6 + $0x3c] sm:$0xf]
    %v193 = vld [vmem:[%s4] sm:$0x1]
    %v195 = vlaneseq
    %v196 = vshrl.u32 %v195, 7
    %v197 = vsub.s32 0, %v196
    %v198 = vrot.slane %v193, %v197
    %v216 = vunpack.c.l.b16 %v177
    %v217 = vunpack.c.l.b16 %v178
    %v218 = vunpack.c.l.b16 %v179
    %v219 = vunpack.c.l.b16 %v180
    %v220 = vunpack.c.l.b16 %v181
    %v221 = vunpack.c.l.b16 %v182
    %v222 = vunpack.c.l.b16 %v183
    %v223 = vunpack.c.l.b16 %v184
    %v224 = vunpack.c.l.b16 %v185
    %v225 = vunpack.c.l.b16 %v186
    %v226 = vunpack.c.l.b16 %v187
    %v227 = vunpack.c.l.b16 %v188
    %v228 = vunpack.c.l.b16 %v189
    %v229 = vunpack.c.l.b16 %v190
    %v230 = vunpack.c.l.b16 %v191
    %v231 = vunpack.c.l.b16 %v192
    %v232 = vpack.c.b16 %v217, %v216
    %v233 = vpack.c.b16 %v219, %v218
    %v234 = vpack.c.b16 %v221, %v220
    %v235 = vpack.c.b16 %v223, %v222
    %v236 = vpack.c.b16 %v225, %v224
    %v237 = vpack.c.b16 %v227, %v226
    %v238 = vpack.c.b16 %v229, %v228
    %v239 = vpack.c.b16 %v231, %v230
    %248 = vmatprep.subr.bf16.mxu0 0
    %249 = vmatpush1.bf16.msra.mxu0 %v232
    %250 = vmatprep.subr.bf16.mxu0 0
    %251 = vmatpush1.bf16.msra.mxu0 %v233
    %252 = vmatprep.subr.bf16.mxu0 0
    %253 = vmatpush1.bf16.msra.mxu0 %v234
    %254 = vmatprep.subr.bf16.mxu0 0
    %255 = vmatpush1.bf16.msra.mxu0 %v235
    %256 = vmatprep.subr.bf16.mxu0 0
    %257 = vmatpush1.bf16.msra.mxu0 %v236
    %258 = vmatprep.subr.bf16.mxu0 0
    %259 = vmatpush1.bf16.msra.mxu0 %v237
    %260 = vmatprep.subr.bf16.mxu0 0
    %261 = vmatpush1.bf16.msra.mxu0 %v238
    %262 = vmatprep.subr.bf16.mxu0 0
    %263 = vmatpush1.bf16.msra.mxu0 %v239
    %264 = vmatprep.subr.bf16.mxu0 0
    %265 = vmatpush1.bf16.msra.mxu0 0
    %266 = vmatprep.subr.bf16.mxu0 0
    %267 = vmatpush1.bf16.msra.mxu0 0
    %268 = vmatprep.subr.bf16.mxu0 0
    %269 = vmatpush1.bf16.msra.mxu0 0
    %270 = vmatprep.subr.bf16.mxu0 0
    %271 = vmatpush1.bf16.msra.mxu0 0
    %272 = vmatprep.subr.bf16.mxu0 0
    %273 = vmatpush1.bf16.msra.mxu0 0
    %274 = vmatprep.subr.bf16.mxu0 0
    %275 = vmatpush1.bf16.msra.mxu0 0
    %276 = vmatprep.subr.bf16.mxu0 0
    %277 = vmatpush1.bf16.msra.mxu0 0
    %278 = vmatprep.subr.bf16.mxu0 0
    %279 = vmatpush1.bf16.msra.mxu0 0
    %280 = vmatprep.mubr.bf16.mxu0 0
    %281 = vmatmul.mubr.bf16.gmra.mrb[0].mxu0 %v176
    %v282 = vpop.f32.mrb[0].mxu0
    %v283 = vadd.f32 %v198, %v282
    %v284 = vpop.f32.mrb[0].mxu0
    %v285 = vpop.f32.mrb[0].mxu0
    %v286 = vpop.f32.mrb[0].mxu0
    %287 = vdwg.mxu0
    %v288 = vmax.f32 %v283, 0.0
    %v289 = vpack.c.bf16 %v288, %v288
    %v290 = vld [vmem:[#allocation7] sm:$0xf]
    %v291 = vld [vmem:[#allocation7 + $0x4] sm:$0xf]
    %v292 = vld [vmem:[#allocation7 + $0x8] sm:$0xf]
    %v293 = vld [vmem:[#allocation7 + $0xc] sm:$0xf]
    %v294 = vld [vmem:[#allocation7 + $0x10] sm:$0xf]
    %v295 = vld [vmem:[#allocation7 + $0x14] sm:$0xf]
    %v296 = vld [vmem:[#allocation7 + $0x18] sm:$0xf]
    %v297 = vld [vmem:[#allocation7 + $0x1c] sm:$0xf]
    %v298 = vld [vmem:[#allocation7 + $0x20] sm:$0xf]
    %v299 = vld [vmem:[#allocation7 + $0x24] sm:$0xf]
    %v300 = vld [vmem:[#allocation7 + $0x28] sm:$0xf]
    %v301 = vld [vmem:[#allocation7 + $0x2c] sm:$0xf]
    %v302 = vld [vmem:[#allocation7 + $0x30] sm:$0xf]
    %v303 = vld [vmem:[#allocation7 + $0x34] sm:$0xf]
    %v304 = vld [vmem:[#allocation7 + $0x38] sm:$0xf]
    %v305 = vld [vmem:[#allocation7 + $0x3c] sm:$0xf]
    %v306 = vld [vmem:[%s6] sm:$0x1]
    %v308 = vlaneseq
    %v309 = vshrl.u32 %v308, 7
    %v310 = vsub.s32 0, %v309
    %v311 = vrot.slane %v306, %v310
    %v329 = vunpack.c.l.b16 %v290
    %v330 = vunpack.c.l.b16 %v291
    %v331 = vunpack.c.l.b16 %v292
    %v332 = vunpack.c.l.b16 %v293
    %v333 = vunpack.c.l.b16 %v294
    %v334 = vunpack.c.l.b16 %v295
    %v335 = vunpack.c.l.b16 %v296
    %v336 = vunpack.c.l.b16 %v297
    %v337 = vunpack.c.l.b16 %v298
    %v338 = vunpack.c.l.b16 %v299
    %v339 = vunpack.c.l.b16 %v300
    %v340 = vunpack.c.l.b16 %v301
    %v341 = vunpack.c.l.b16 %v302
    %v342 = vunpack.c.l.b16 %v303
    %v343 = vunpack.c.l.b16 %v304
    %v344 = vunpack.c.l.b16 %v305
    %v345 = vpack.c.b16 %v330, %v329
    %v346 = vpack.c.b16 %v332, %v331
    %v347 = vpack.c.b16 %v334, %v333
    %v348 = vpack.c.b16 %v336, %v335
    %v349 = vpack.c.b16 %v338, %v337
    %v350 = vpack.c.b16 %v340, %v339
    %v351 = vpack.c.b16 %v342, %v341
    %v352 = vpack.c.b16 %v344, %v343
    %361 = vmatprep.subr.bf16.mxu0 0
    %362 = vmatpush1.bf16.msra.mxu0 %v345
    %363 = vmatprep.subr.bf16.mxu0 0
    %364 = vmatpush1.bf16.msra.mxu0 %v346
    %365 = vmatprep.subr.bf16.mxu0 0
    %366 = vmatpush1.bf16.msra.mxu0 %v347
    %367 = vmatprep.subr.bf16.mxu0 0
    %368 = vmatpush1.bf16.msra.mxu0 %v348
    %369 = vmatprep.subr.bf16.mxu0 0
    %370 = vmatpush1.bf16.msra.mxu0 %v349
    %371 = vmatprep.subr.bf16.mxu0 0
    %372 = vmatpush1.bf16.msra.mxu0 %v350
    %373 = vmatprep.subr.bf16.mxu0 0
    %374 = vmatpush1.bf16.msra.mxu0 %v351
    %375 = vmatprep.subr.bf16.mxu0 0
    %376 = vmatpush1.bf16.msra.mxu0 %v352
    %377 = vmatprep.subr.bf16.mxu0 0
    %378 = vmatpush1.bf16.msra.mxu0 0
    %379 = vmatprep.subr.bf16.mxu0 0
    %380 = vmatpush1.bf16.msra.mxu0 0
    %381 = vmatprep.subr.bf16.mxu0 0
    %382 = vmatpush1.bf16.msra.mxu0 0
    %383 = vmatprep.subr.bf16.mxu0 0
    %384 = vmatpush1.bf16.msra.mxu0 0
    %385 = vmatprep.subr.bf16.mxu0 0
    %386 = vmatpush1.bf16.msra.mxu0 0
    %387 = vmatprep.subr.bf16.mxu0 0
    %388 = vmatpush1.bf16.msra.mxu0 0
    %389 = vmatprep.subr.bf16.mxu0 0
    %390 = vmatpush1.bf16.msra.mxu0 0
    %391 = vmatprep.subr.bf16.mxu0 0
    %392 = vmatpush1.bf16.msra.mxu0 0
    %393 = vmatprep.mubr.bf16.mxu0 0
    %394 = vmatmul.mubr.bf16.gmra.mrb[0].mxu0 %v289
    %v395 = vpop.f32.mrb[0].mxu0
    %v396 = vadd.f32 %v311, %v395
    %v397 = vpop.f32.mrb[0].mxu0
    %v398 = vpop.f32.mrb[0].mxu0
    %v399 = vpop.f32.mrb[0].mxu0
    %400 = vdwg.mxu0
    %v401 = vmax.f32 %v396, 0.0
    %v402 = vpack.c.bf16 %v401, %v401
    %v403 = vld [vmem:[#allocation9] sm:$0xf]
    %v404 = vld [vmem:[#allocation9 + $0x4] sm:$0xf]
    %v405 = vld [vmem:[#allocation9 + $0x8] sm:$0xf]
    %v406 = vld [vmem:[#allocation9 + $0xc] sm:$0xf]
    %v407 = vld [vmem:[#allocation9 + $0x10] sm:$0xf]
    %v408 = vld [vmem:[#allocation9 + $0x14] sm:$0xf]
    %v409 = vld [vmem:[#allocation9 + $0x18] sm:$0xf]
    %v410 = vld [vmem:[#allocation9 + $0x1c] sm:$0xf]
    %v411 = vld [vmem:[#allocation9 + $0x20] sm:$0xf]
    %v412 = vld [vmem:[#allocation9 + $0x24] sm:$0xf]
    %v413 = vld [vmem:[#allocation9 + $0x28] sm:$0xf]
    %v414 = vld [vmem:[#allocation9 + $0x2c] sm:$0xf]
    %v415 = vld [vmem:[#allocation9 + $0x30] sm:$0xf]
    %v416 = vld [vmem:[#allocation9 + $0x34] sm:$0xf]
    %v417 = vld [vmem:[#allocation9 + $0x38] sm:$0xf]
    %v418 = vld [vmem:[#allocation9 + $0x3c] sm:$0xf]
    %v419 = vld [vmem:[%s8] sm:$0x1]
    %v421 = vlaneseq
    %v422 = vshrl.u32 %v421, 7
    %v423 = vsub.s32 0, %v422
    %v424 = vrot.slane %v419, %v423
    %v442 = vunpack.c.l.b16 %v403
    %v443 = vunpack.c.l.b16 %v404
    %v444 = vunpack.c.l.b16 %v405
    %v445 = vunpack.c.l.b16 %v406
    %v446 = vunpack.c.l.b16 %v407
    %v447 = vunpack.c.l.b16 %v408
    %v448 = vunpack.c.l.b16 %v409
    %v449 = vunpack.c.l.b16 %v410
    %v450 = vunpack.c.l.b16 %v411
    %v451 = vunpack.c.l.b16 %v412
    %v452 = vunpack.c.l.b16 %v413
    %v453 = vunpack.c.l.b16 %v414
    %v454 = vunpack.c.l.b16 %v415
    %v455 = vunpack.c.l.b16 %v416
    %v456 = vunpack.c.l.b16 %v417
    %v457 = vunpack.c.l.b16 %v418
    %v458 = vpack.c.b16 %v443, %v442
    %v459 = vpack.c.b16 %v445, %v444
    %v460 = vpack.c.b16 %v447, %v446
    %v461 = vpack.c.b16 %v449, %v448
    %v462 = vpack.c.b16 %v451, %v450
    %v463 = vpack.c.b16 %v453, %v452
    %v464 = vpack.c.b16 %v455, %v454
    %v465 = vpack.c.b16 %v457, %v456
    %474 = vmatprep.subr.bf16.mxu0 0
    %475 = vmatpush1.bf16.msra.mxu0 %v458
    %476 = vmatprep.subr.bf16.mxu0 0
    %477 = vmatpush1.bf16.msra.mxu0 %v459
    %478 = vmatprep.subr.bf16.mxu0 0
    %479 = vmatpush1.bf16.msra.mxu0 %v460
    %480 = vmatprep.subr.bf16.mxu0 0
    %481 = vmatpush1.bf16.msra.mxu0 %v461
    %482 = vmatprep.subr.bf16.mxu0 0
    %483 = vmatpush1.bf16.msra.mxu0 %v462
    %484 = vmatprep.subr.bf16.mxu0 0
    %485 = vmatpush1.bf16.msra.mxu0 %v463
    %486 = vmatprep.subr.bf16.mxu0 0
    %487 = vmatpush1.bf16.msra.mxu0 %v464
    %488 = vmatprep.subr.bf16.mxu0 0
    %489 = vmatpush1.bf16.msra.mxu0 %v465
    %490 = vmatprep.subr.bf16.mxu0 0
    %491 = vmatpush1.bf16.msra.mxu0 0
    %492 = vmatprep.subr.bf16.mxu0 0
    %493 = vmatpush1.bf16.msra.mxu0 0
    %494 = vmatprep.subr.bf16.mxu0 0
    %495 = vmatpush1.bf16.msra.mxu0 0
    %496 = vmatprep.subr.bf16.mxu0 0
    %497 = vmatpush1.bf16.msra.mxu0 0
    %498 = vmatprep.subr.bf16.mxu0 0
    %499 = vmatpush1.bf16.msra.mxu0 0
    %500 = vmatprep.subr.bf16.mxu0 0
    %501 = vmatpush1.bf16.msra.mxu0 0
    %502 = vmatprep.subr.bf16.mxu0 0
    %503 = vmatpush1.bf16.msra.mxu0 0
    %504 = vmatprep.subr.bf16.mxu0 0
    %505 = vmatpush1.bf16.msra.mxu0 0
    %506 = vmatprep.mubr.bf16.mxu0 0
    %507 = vmatmul.mubr.bf16.gmra.mrb[0].mxu0 %v402
    %v508 = vpop.f32.mrb[0].mxu0
    %v509 = vadd.f32 %v424, %v508
    %v510 = vpop.f32.mrb[0].mxu0
    %v511 = vpop.f32.mrb[0].mxu0
    %v512 = vpop.f32.mrb[0].mxu0
    %513 = vdwg.mxu0
    %v514 = vmax.f32 %v509, 0.0
    %v515 = vpack.c.bf16 %v514, %v514
    %v516 = vld [vmem:[#allocation10] sm:$0xf]
    %v517 = vld [vmem:[#allocation10 + $0x4] sm:$0xf]
    %v518 = vld [vmem:[#allocation10 + $0x8] sm:$0xf]
    %v519 = vld [vmem:[#allocation10 + $0xc] sm:$0xf]
    %v520 = vld [vmem:[#allocation10 + $0x10] sm:$0xf]
    %v521 = vld [vmem:[#allocation10 + $0x14] sm:$0xf]
    %v522 = vld [vmem:[#allocation10 + $0x18] sm:$0xf]
    %v523 = vld [vmem:[#allocation10 + $0x1c] sm:$0xf]
    %v524 = vld [vmem:[#allocation10 + $0x20] sm:$0xf]
    %v525 = vld [vmem:[#allocation10 + $0x24] sm:$0xf]
    %v526 = vld [vmem:[#allocation10 + $0x28] sm:$0xf]
    %v527 = vld [vmem:[#allocation10 + $0x2c] sm:$0xf]
    %v528 = vld [vmem:[#allocation10 + $0x30] sm:$0xf]
    %v529 = vld [vmem:[#allocation10 + $0x34] sm:$0xf]
    %v530 = vld [vmem:[#allocation10 + $0x38] sm:$0xf]
    %v531 = vld [vmem:[#allocation10 + $0x3c] sm:$0xf]
    %v532 = vld [vmem:[%s10] sm:$0x1]
    %v534 = vlaneseq
    %v535 = vshrl.u32 %v534, 7
    %v536 = vsub.s32 0, %v535
    %v537 = vrot.slane %v532, %v536
    %v555 = vunpack.c.l.b16 %v516
    %v556 = vunpack.c.l.b16 %v517
    %v557 = vunpack.c.l.b16 %v518
    %v558 = vunpack.c.l.b16 %v519
    %v559 = vunpack.c.l.b16 %v520
    %v560 = vunpack.c.l.b16 %v521
    %v561 = vunpack.c.l.b16 %v522
    %v562 = vunpack.c.l.b16 %v523
    %v563 = vunpack.c.l.b16 %v524
    %v564 = vunpack.c.l.b16 %v525
    %v565 = vunpack.c.l.b16 %v526
    %v566 = vunpack.c.l.b16 %v527
    %v567 = vunpack.c.l.b16 %v528
    %v568 = vunpack.c.l.b16 %v529
    %v569 = vunpack.c.l.b16 %v530
    %v570 = vunpack.c.l.b16 %v531
    %v571 = vpack.c.b16 %v556, %v555
    %v572 = vpack.c.b16 %v558, %v557
    %v573 = vpack.c.b16 %v560, %v559
    %v574 = vpack.c.b16 %v562, %v561
    %v575 = vpack.c.b16 %v564, %v563
    %v576 = vpack.c.b16 %v566, %v565
    %v577 = vpack.c.b16 %v568, %v567
    %v578 = vpack.c.b16 %v570, %v569
    %587 = vmatprep.subr.bf16.mxu0 0
    %588 = vmatpush1.bf16.msra.mxu0 %v571
    %589 = vmatprep.subr.bf16.mxu0 0
    %590 = vmatpush1.bf16.msra.mxu0 %v572
    %591 = vmatprep.subr.bf16.mxu0 0
    %592 = vmatpush1.bf16.msra.mxu0 %v573
    %593 = vmatprep.subr.bf16.mxu0 0
    %594 = vmatpush1.bf16.msra.mxu0 %v574
    %595 = vmatprep.subr.bf16.mxu0 0
    %596 = vmatpush1.bf16.msra.mxu0 %v575
    %597 = vmatprep.subr.bf16.mxu0 0
    %598 = vmatpush1.bf16.msra.mxu0 %v576
    %599 = vmatprep.subr.bf16.mxu0 0
    %600 = vmatpush1.bf16.msra.mxu0 %v577
    %601 = vmatprep.subr.bf16.mxu0 0
    %602 = vmatpush1.bf16.msra.mxu0 %v578
    %603 = vmatprep.subr.bf16.mxu0 0
    %604 = vmatpush1.bf16.msra.mxu0 0
    %605 = vmatprep.subr.bf16.mxu0 0
    %606 = vmatpush1.bf16.msra.mxu0 0
    %607 = vmatprep.subr.bf16.mxu0 0
    %608 = vmatpush1.bf16.msra.mxu0 0
    %609 = vmatprep.subr.bf16.mxu0 0
    %610 = vmatpush1.bf16.msra.mxu0 0
    %611 = vmatprep.subr.bf16.mxu0 0
    %612 = vmatpush1.bf16.msra.mxu0 0
    %613 = vmatprep.subr.bf16.mxu0 0
    %614 = vmatpush1.bf16.msra.mxu0 0
    %615 = vmatprep.subr.bf16.mxu0 0
    %616 = vmatpush1.bf16.msra.mxu0 0
    %617 = vmatprep.subr.bf16.mxu0 0
    %618 = vmatpush1.bf16.msra.mxu0 0
    %619 = vmatprep.mubr.bf16.mxu0 0
    %620 = vmatmul.mubr.bf16.gmra.mrb[0].mxu0 %v515
    %v621 = vpop.f32.mrb[0].mxu0
    %v622 = vadd.f32 %v537, %v621
    %v623 = vpop.f32.mrb[0].mxu0
    %v624 = vpop.f32.mrb[0].mxu0
    %v625 = vpop.f32.mrb[0].mxu0
    %626 = vdwg.mxu0
    %vm627 = vcmask 31744
    %628 = vst.msk [vmem:[%s11] sm:$0xff] %vm627, %v622
    // Predicated region
    $region70: #{tpu_custom_call.1} parent=1 // pred_check
      _
    $region71: #{tpu_custom_call.1} parent=1 // pred_check_branch
      %630 = sbr.rel (0) target = $region73
    $region72: #{tpu_custom_call.1} parent=1 // pred_region
      _
    $region73: #{tpu_custom_call.1} parent=1 // pred_fallthru
      _
    // Predicated region
    $region74: #{tpu_custom_call.1} parent=1 // pred_check
      _
    $region75: #{tpu_custom_call.1} parent=1 // pred_check_branch
      %632 = sbr.rel (0) target = $region77
    $region76: #{tpu_custom_call.1} parent=1 // pred_region
      _
    $region77: #{tpu_custom_call.1} parent=1 // pred_fallthru
      _
    %633 = vsyncpa [#allocation3], 1
    %634 = vsyncpa [#allocation5], 1
    %635 = vsyncpa [#allocation8], 1
    %636 = vsyncpa [#allocation11], 1

</llo_original>
